<compile_context>
chip_gen: v5e
topology: v5e:2x2
jax: 0.10.0
libtpu: 0.0.40
codegen_flags: <defaults>
</compile_context>

<pallas_src>
import jax
import jax.numpy as jnp
from jax.experimental import pallas as pl
from jax.experimental.pallas import tpu as pltpu


def _sublane_pack(dtype):
    # Sublane packing multiple by element width (f32 -> 8, bf16 -> 16, int8/fp8 -> 32).
    return {4: 8, 2: 16, 1: 32}.get(jnp.dtype(dtype).itemsize, 8)


def _pick_tiles(rows, lanes, itemsize, sub):
    """Pick a ~4 MiB block; dims are either a legal multiple (sub/128) or the full extent."""
    tile_l = lanes if lanes <= 4096 else 4096           # full extent or multiple of 128
    target_elems = (4 << 20) // itemsize                # ~4 MiB per x/out block
    tr = max(sub, (target_elems // max(tile_l, 1)) // sub * sub)
    tile_r = rows if rows <= tr else tr                 # full extent or multiple of sub
    return tile_r, tile_l


def _lane_dense_shape(total):
    """Widest lane extent (multiple of 128, <= 4096) that evenly divides `total`."""
    start = min(4096, total) // 128 * 128
    for lanes in range(start, 0, -128):
        if total % lanes == 0:
            return total // lanes, lanes
    return None


# ----------------------------- kernels --------------------------------------

def _mprelu_rowwise_kernel(x_ref, w_ref, o_ref):
    # x_ref: (TR, TL) activation tile; w_ref: (TR, 1) per-row (per-channel) weight.
    x = x_ref[...]
    o_ref[...] = jnp.where(x > 0, w_ref[...] * x, x)


def _mprelu_scalar_kernel(x_ref, w_ref, o_ref):
    # x_ref: (TR, TL) activation tile; w_ref: (1, 1) f32 scalar in SMEM.
    x = x_ref[...]
    w = w_ref[0, 0].astype(x.dtype)
    o_ref[...] = jnp.where(x > 0, w * x, x)


# ----------------------------- wrapper --------------------------------------

def mprelu(x, weight):
    """x: (N, C, H, W); weight: (num_parameters,) with num_parameters in {1, C}."""
    n, c, h, wd = x.shape
    num_params = weight.shape[0]
    assert num_params in (1, c), "PReLU weight must have 1 or C parameters"

    dtype = x.dtype
    itemsize = jnp.dtype(dtype).itemsize
    sub = _sublane_pack(dtype)

    if num_params == 1:
        # Shared-weight fast path: arbitrary lane-dense flattening + SMEM scalar.
        total = n * c * h * wd
        fact = _lane_dense_shape(total)
        rows, lanes = fact if fact is not None else (n * c, h * wd)
        x2d = x.reshape(rows, lanes)
        w_arg = weight.reshape(1, 1).astype(jnp.float32)
        kernel = _mprelu_scalar_kernel
        rowwise = False
    else:
        # Per-channel path: one weight scalar per (n, c) row of the slab.
        rows, lanes = n * c, h * wd
        x2d = x.reshape(rows, lanes)
        w_arg = jnp.broadcast_to(weight.astype(dtype)[None, :], (n, c)).reshape(rows, 1)
        kernel = _mprelu_rowwise_kernel
        rowwise = True

    tile_r, tile_l = _pick_tiles(rows, lanes, itemsize, sub)
    row_tiles = pl.cdiv(rows, tile_r)
    lane_tiles = pl.cdiv(lanes, tile_l)

    if lane_tiles == 1:
        # Lane extent fits in one tile: 1-D grid over row tiles only.
        grid = (row_tiles,)
        x_spec = pl.BlockSpec((tile_r, tile_l), lambda i: (i, 0))
        o_spec = pl.BlockSpec((tile_r, tile_l), lambda i: (i, 0))
        w_row_spec = pl.BlockSpec((tile_r, 1), lambda i: (i, 0))
        semantics = ("parallel",)
    else:
        grid = (row_tiles, lane_tiles)
        x_spec = pl.BlockSpec((tile_r, tile_l), lambda i, j: (i, j))
        o_spec = pl.BlockSpec((tile_r, tile_l), lambda i, j: (i, j))
        # Weight column: block index constant along the lane axis -> DMA only
        # re-issued when the row tile changes.
        w_row_spec = pl.BlockSpec((tile_r, 1), lambda i, j: (i, 0))
        semantics = ("parallel", "parallel")

    if rowwise:
        w_spec = w_row_spec
        w_pipe_bytes = 4 * tile_r * 128 * itemsize       # lane-padded, double-buffered
    else:
        w_spec = pl.BlockSpec((1, 1), lambda *_: (0, 0),
                              memory_space=pltpu.MemorySpace.SMEM)
        w_pipe_bytes = 0

    # x + out double-buffered, plus weight pipeline buffers, plus slack.
    block_bytes = tile_r * tile_l * itemsize
    pipeline_bytes = 4 * block_bytes + w_pipe_bytes + (2 << 20)
    vmem_limit = min(64 << 20, max(32 << 20, int(1.5 * pipeline_bytes)))

    out2d = pl.pallas_call(
        kernel,
        out_shape=jax.ShapeDtypeStruct((rows, lanes), dtype),
        grid_spec=pl.GridSpec(
            grid=grid,
            in_specs=[x_spec, w_spec],
            out_specs=o_spec,
        ),
        compiler_params=pltpu.CompilerParams(
            dimension_semantics=semantics,
            vmem_limit_bytes=vmem_limit,
        ),
    )(x2d, w_arg)

    return out2d.reshape(n, c, h, wd)


def mprelu_ref(x, weight):
    """Pure-JAX reference: -prelu(-x, w) with channel broadcasting."""
    c = x.shape[1]
    w = jnp.broadcast_to(weight, (c,)).reshape(1, c, 1, 1).astype(x.dtype)
    neg_x = -x
    prelu = jnp.maximum(neg_x, 0.0) + w * jnp.minimum(neg_x, 0.0)
    return -prelu


if __name__ == "__main__":
    key = jax.random.PRNGKey(0)
    N, C, H, W = 2, 4, 16, 16

    x = jax.random.normal(key, (N, C, H, W), dtype=jnp.float32)

    # Per-channel MPReLU (num_parameters == C), init matching Tensor(C).fill_(0.25).
    weight_c = jnp.full((C,), 0.25, dtype=jnp.float32)
    out_c = jax.block_until_ready(mprelu(x, weight_c))
    ref_c = mprelu_ref(x, weight_c)
    assert out_c.shape == x.shape
    assert jnp.allclose(out_c, ref_c, atol=1e-6), "per-channel mismatch vs reference"

    # Shared-weight fast path (num_parameters == 1), bf16 end-to-end.
    x_bf16 = x.astype(jnp.bfloat16)
    weight_1 = jnp.full((1,), 0.25, dtype=jnp.bfloat16)
    out_1 = jax.block_until_ready(mprelu(x_bf16, weight_1))
    ref_1 = mprelu_ref(x_bf16, weight_1)
    assert out_1.shape == x.shape and out_1.dtype == jnp.bfloat16
    assert jnp.allclose(out_1.astype(jnp.float32), ref_1.astype(jnp.float32),
                        atol=1e-2), "shared-weight mismatch vs reference"

    print("KERNEL_OK")
</pallas_src>

<mosaic_0001>
module attributes {stable_mosaic.version = 11 : i64} {
  func.func @_mprelu_rowwise_kernel(%arg0: i32, %arg1: memref<8x256xf32, #tpu.memory_space<vmem>>, %arg2: memref<8x1xf32, #tpu.memory_space<vmem>>, %arg3: memref<8x256xf32, #tpu.memory_space<vmem>>) attributes {dimension_semantics = [#tpu.dimension_semantics<parallel>], iteration_bounds = array<i64: 1>, scalar_prefetch = 0 : i64, scratch_operands = 0 : i64, tpu.core_type = #tpu.core_type<tc>, window_params = [{transform_indices = @transform_0, window_bounds = array<i64: 8, 256>}, {transform_indices = @transform_1, window_bounds = array<i64: 8, 1>}, {transform_indices = @transform_2, window_bounds = array<i64: 8, 256>}]} {
    %c0 = arith.constant 0 : index
    %c0_0 = arith.constant 0 : index
    %0 = vector.load %arg1[%c0, %c0_0] : memref<8x256xf32, #tpu.memory_space<vmem>>, vector<8x256xf32>
    %cst = arith.constant 0.000000e+00 : f32
    %1 = vector.broadcast %cst : f32 to vector<8x256xf32>
    %2 = arith.cmpf ogt, %0, %1 : vector<8x256xf32>
    %c0_1 = arith.constant 0 : index
    %c0_2 = arith.constant 0 : index
    %3 = vector.load %arg2[%c0_1, %c0_2] : memref<8x1xf32, #tpu.memory_space<vmem>>, vector<8x1xf32>
    %4 = vector.broadcast %3 : vector<8x1xf32> to vector<8x256xf32>
    %5 = arith.mulf %4, %0 : vector<8x256xf32>
    %6 = arith.select %2, %5, %0 : vector<8x256xi1>, vector<8x256xf32>
    %c0_3 = arith.constant 0 : index
    %c0_4 = arith.constant 0 : index
    %7 = vector.load %arg3[%c0_3, %c0_4] : memref<8x256xf32, #tpu.memory_space<vmem>>, vector<8x256xf32>
    tpu.vector_store %arg3[%c0_3, %c0_4], %6 {strides = array<i32>} : memref<8x256xf32, #tpu.memory_space<vmem>>, vector<8x256xf32>,
    return
  }
  func.func @transform_0(%arg0: i32) -> (i32, i32) {
    %c0_i32 = arith.constant 0 : i32
    %c0_i32_0 = arith.constant 0 : i32
    return %arg0, %c0_i32 : i32, i32
  }
  func.func @transform_1(%arg0: i32) -> (i32, i32) {
    %c0_i32 = arith.constant 0 : i32
    %c0_i32_0 = arith.constant 0 : i32
    return %arg0, %c0_i32 : i32, i32
  }
  func.func @transform_2(%arg0: i32) -> (i32, i32) {
    %c0_i32 = arith.constant 0 : i32
    %c0_i32_0 = arith.constant 0 : i32
    return %arg0, %c0_i32 : i32, i32
  }
}

</mosaic_0001>

<llo_original>
// kernel: tpu_custom_call.1
$region0: #{tpu_custom_call.1}
  #allocation0 [shape = 'u32[]', space=smem, size = 0x4, offset = 0x4, fixed_abs, tag = 'smem constant byte address 0x4 - core index']
  #allocation1 [shape = 'u32[72,128]{1,0:T(1,128)}', space=vmem, size = 0x9000, scoped, tag = 'internal scratch']
  %s0 = inlined_call_operand.hbm [shape: f32[8,256], index: 0, kind: input, shape index: {}]
  %s1 = inlined_call_operand.vmem [shape: f32[8,1], index: 1, kind: input, shape index: {}]
  %s2 = inlined_call_operand.hbm [shape: f32[8,256], index: 2, kind: output, shape index: {}]
  %s3 = sld [smem:[#allocation0]]
  $region22: #{tpu_custom_call.1} parent=0
    _
  %s5 = ssub.s32 1, %s3
  %s6 = scalar_select 0, %s5, %s3
  $region1: #{tpu_custom_call.1} parent=0
    #allocation2 [shape = 'u8[8192]{0}', space=vmem, size = 0x2000, scoped, tag = 'input window, operand 0, single buffered']
    #allocation3 [shape = 's32[1]{0}', space=sflag, size = 0x4, scoped, tag = 'scoped memory for tpu_custom_call.1']
    #allocation4 [shape = 's32[1]{0}', space=sflag, size = 0x4, scoped, tag = 'scoped memory for tpu_custom_call.1']
    #allocation5 [shape = 'u8[8192]{0}', space=vmem, size = 0x2000, scoped, tag = 'output window, operand 0, single buffered']
    %7 = vsyncpa [#allocation3], 0
    %8 = vsyncpa [#allocation4], 0
    // Predicated region
    $region2: #{tpu_custom_call.1} parent=1 // pred_check
      _
    $region3: #{tpu_custom_call.1} parent=1 // pred_check_branch
      %10 = sbr.rel (0) target = $region5
    $region4: #{tpu_custom_call.1} parent=1 // pred_region
      %12 = vsyncadd [#allocation3], 0
      %s14 = sshll.u32 %s0, 4
      %s15 = int_to_ptr.hbm [resolvable:$true] %s14
      %s16 = sshll.u32 [#allocation2], 4
      %s17 = int_to_ptr.vmem [resolvable:$true] %s16
      %19 = dma.hbm_to_vmem [thread:$0]  %s15, 256, %s17, [#allocation3]
    $region5: #{tpu_custom_call.1} parent=1 // pred_fallthru
      _
    // Predicated region
    $region6: #{tpu_custom_call.1} parent=1 // pred_check
      _
    $region7: #{tpu_custom_call.1} parent=1 // pred_check_branch
      %21 = sbr.rel (0) target = $region9
    $region8: #{tpu_custom_call.1} parent=1 // pred_region
      _
    $region9: #{tpu_custom_call.1} parent=1 // pred_fallthru
      _
    // Predicated region
    $region10: #{tpu_custom_call.1} parent=1 // pred_check
      _
    $region11: #{tpu_custom_call.1} parent=1 // pred_check_branch
      %23 = sbr.rel (0) target = $region13
    $region12: #{tpu_custom_call.1} parent=1 // pred_region
      %25 = dma.done [#allocation3], 256
    $region13: #{tpu_custom_call.1} parent=1 // pred_fallthru
      _
    %v26 = vld [vmem:[#allocation2] sm:$0xff]
    %v27 = vld [vmem:[#allocation2 + $0x8] sm:$0xff]
    %vm28 = vcmp.gt.f32.partialorder %v26, 0.0
    %vm29 = vcmp.gt.f32.partialorder %v27, 0.0
    %v30 = vld [vmem:[%s1] sm:$0xff]
    %32 = vset.pattern.permute.xlu0 0
    %33 = vperm.xlu0 %32, %v30
    %v34 = vpop.permute.xlu0 %33
    %v36 = vmul.f32 %v34, %v26
    %v37 = vmul.f32 %v34, %v27
    %v38 = vsel %vm28, %v36, %v26
    %v39 = vsel %vm29, %v37, %v27
    %40 = vst [vmem:[#allocation5] sm:$0xff] %v38
    %41 = vst [vmem:[#allocation5 + $0x8] sm:$0xff] %v39
    // Predicated region
    $region14: #{tpu_custom_call.1} parent=1 // pred_check
      _
    $region15: #{tpu_custom_call.1} parent=1 // pred_check_branch
      %43 = sbr.rel (0) target = $region17
    $region16: #{tpu_custom_call.1} parent=1 // pred_region
      %45 = vsyncadd [#allocation4], 0
      %s47 = sshll.u32 [#allocation5], 4
      %s48 = int_to_ptr.vmem [resolvable:$true] %s47
      %s49 = sshll.u32 %s2, 4
      %s50 = int_to_ptr.hbm [resolvable:$true] %s49
      %52 = dma.vmem_to_hbm [thread:$0]  %s48, 256, %s50, [#allocation4]
    $region17: #{tpu_custom_call.1} parent=1 // pred_fallthru
      _
    // Predicated region
    $region18: #{tpu_custom_call.1} parent=1 // pred_check
      _
    $region19: #{tpu_custom_call.1} parent=1 // pred_check_branch
      %54 = sbr.rel (0) target = $region21
    $region20: #{tpu_custom_call.1} parent=1 // pred_region
      %56 = dma.done [#allocation4], 256
    $region21: #{tpu_custom_call.1} parent=1 // pred_fallthru
      _
    %57 = vsyncpa [#allocation3], 1
    %58 = vsyncpa [#allocation4], 1

</llo_original>
